<compile_context>
chip_gen: v5e
topology: v5e:2x2
jax: 0.10.0
libtpu: 0.0.40
codegen_flags: <defaults>
</compile_context>

<pallas_src>
import functools

import jax
import jax.numpy as jnp
from jax.experimental import pallas as pl
from jax.experimental.pallas import tpu as pltpu

LANE = 128   # pad all feature dims to the TPU lane width
CPAD = 8     # pad the channel dim to the f32 sublane width


# ----------------------------------------------------------------------------
# Fused Pallas kernel: GAP -> backbone Linear -> projector -> normalize -> loss
# ----------------------------------------------------------------------------
def simclr_fused_kernel(y_ref, wb_ref, bb_ref, w1_ref, b1_ref, w2_ref, b2_ref,
                        loss_ref, *, inv_spatial, inv_sqrt_temp, n_pair):
    """Fused SimCLR forward.

    y_ref  : (2B, CP, S) bf16  both augmented views (channels zero-padded)
    wb_ref : (CP, RP)    bf16  backbone Linear weight
    bb_ref : (1, RP) f32   w1_ref: (RP, HP) bf16   b1_ref: (1, HP) f32
    w2_ref : (HP, EP) bf16 b2_ref: (1, EP) f32
    loss_ref: (1, 1) f32 SMEM scalar output.

    RP/HP/EP are zero-padded to 128 lanes and CP to 8 channels; padded
    rows/columns stay exactly zero, so norms and dot products are unchanged.
    """
    # Global average pool over the spatial (lane) axis, in f32 on the VPU
    # (v5e has no bf16 VPU), then bf16 into the MXU.
    yf = y_ref[...].astype(jnp.float32)                         # (2B, CP, S)
    feat = (jnp.sum(yf, axis=2) * inv_spatial).astype(jnp.bfloat16)  # (2B, CP)

    # Backbone stand-in: Linear on pooled features (bf16 MXU, f32 accumulate).
    h0 = jnp.dot(feat, wb_ref[...],
                 preferred_element_type=jnp.float32) + bb_ref[...]

    # Projector: Linear -> ReLU -> Linear.
    h1 = jnp.dot(h0.astype(jnp.bfloat16), w1_ref[...],
                 preferred_element_type=jnp.float32) + b1_ref[...]
    h1 = jnp.maximum(h1, 0.0)
    z = jnp.dot(h1.astype(jnp.bfloat16), w2_ref[...],
                preferred_element_type=jnp.float32) + b2_ref[...]

    # F.normalize(dim=1) via sum-of-squares + rsqrt (EUP), with 1/sqrt(temp)
    # folded in so zs @ zs.T is already sim / temp.  All f32.
    sumsq = jnp.sum(z * z, axis=1, keepdims=True)
    zs = z * (inv_sqrt_temp * jax.lax.rsqrt(jnp.maximum(sumsq, 1e-24)))

    m = zs.shape[0]                                             # 2N rows
    # Gram matmul kept in f32: zs is already in VMEM (no DMA saving from bf16)
    # and 2N=4; cast to bf16 only in the row-tiled production variant.
    logits = jax.lax.dot_general(                               # (2N, 2N)
        zs, zs, (((1,), (1,)), ((), ())),
        preferred_element_type=jnp.float32)

    # logsumexp over j != i (diagonal masked out), f32 throughout.
    row = jax.lax.broadcasted_iota(jnp.int32, (m, m), 0)
    col = jax.lax.broadcasted_iota(jnp.int32, (m, m), 1)
    masked = jnp.where(row == col, jnp.float32(-1e30), logits)
    mx = jnp.max(masked, axis=1, keepdims=True)
    lse = mx + jnp.log(jnp.sum(jnp.exp(masked - mx), axis=1, keepdims=True))

    # Positive of row i is row (i + N) mod 2N; the pair dot is identical for
    # both halves, so mean over 2N positives == mean over N pair dots.
    pos = jnp.sum(zs[:n_pair, :] * zs[n_pair:, :], axis=1, keepdims=True)

    # loss = mean_i [ logsumexp_{j!=i}(sim_ij/t) - sim_{i,pair(i)}/t ]
    loss_ref[0, 0] = jnp.mean(lse) - jnp.mean(pos)


# ----------------------------------------------------------------------------
# One-time parameter preparation: pad feature dims to 128 lanes, cast MXU
# operands to bf16.  (GAP is NOT folded into the weight anymore.)
# ----------------------------------------------------------------------------
def _pad_last(x, target):
    return jnp.pad(x, [(0, 0)] * (x.ndim - 1) + [(0, target - x.shape[-1])])


def prepare_kernel_params(params, *, cp=CPAD, rp=LANE, hp=LANE, ep=LANE):
    c = params["wb"].shape[0]
    wb = jnp.pad(params["wb"],
                 ((0, cp - c), (0, rp - params["wb"].shape[1])))
    w1 = jnp.pad(params["w1"],
                 ((0, rp - params["w1"].shape[0]),
                  (0, hp - params["w1"].shape[1])))
    w2 = jnp.pad(params["w2"],
                 ((0, hp - params["w2"].shape[0]),
                  (0, ep - params["w2"].shape[1])))
    return {
        "wb": wb.astype(jnp.bfloat16),                 # MXU operand -> bf16
        "bb": _pad_last(params["bb"], rp),             # biases stay f32
        "w1": w1.astype(jnp.bfloat16),
        "b1": _pad_last(params["b1"], hp),
        "w2": w2.astype(jnp.bfloat16),
        "b2": _pad_last(params["b2"], ep),
    }


# ----------------------------------------------------------------------------
# pallas_call wrapper (single fused, grid-less call; whole problem in VMEM)
# ----------------------------------------------------------------------------
def simclr_forward(y1, y2, kparams, *, temp):
    b, c, h, w = y1.shape
    s = h * w
    wb, bb = kparams["wb"], kparams["bb"]
    w1, b1 = kparams["w1"], kparams["b1"]
    w2, b2 = kparams["w2"], kparams["b2"]
    cp, rp = wb.shape
    hp, ep = w1.shape[1], w2.shape[1]

    # Stack both views to (2B, C, S), zero-pad channels, cast MXU operand to
    # bf16.  Glue reshape/pad/cast only.
    y = jnp.concatenate([y1, y2], axis=0).reshape(2 * b, c, s)
    y = jnp.pad(y, ((0, 0), (0, cp - c), (0, 0))).astype(jnp.bfloat16)
    tb = y.shape[0]

    flops = (tb * cp * s                                   # GAP adds
             + 2 * (tb * cp * rp + tb * rp * hp + tb * hp * ep + tb * tb * ep))
    bytes_accessed = (2 * (y.size + wb.size + w1.size + w2.size)     # bf16
                      + 4 * (bb.size + b1.size + b2.size) + 4)       # f32
    cost = pl.CostEstimate(flops=flops,
                           transcendentals=tb * tb + 3 * tb,
                           bytes_accessed=bytes_accessed)

    kern = functools.partial(simclr_fused_kernel,
                             inv_spatial=1.0 / float(s),
                             inv_sqrt_temp=float(temp) ** -0.5,
                             n_pair=b)
    vmem = pl.BlockSpec(memory_space=pltpu.MemorySpace.VMEM)
    loss = pl.pallas_call(
        kern,
        out_shape=jax.ShapeDtypeStruct((1, 1), jnp.float32),
        # Grid-less call: full-array VMEM blocks, no double-buffer pipeline.
        in_specs=[vmem] * 7,
        # Scalar loss goes out through SMEM: no masked VMEM store / writeback.
        out_specs=pl.BlockSpec(memory_space=pltpu.MemorySpace.SMEM),
        cost_estimate=cost,
    )(y, wb, bb, w1, b1, w2, b2)
    return loss[0, 0]


# ----------------------------------------------------------------------------
# Pure-JAX reference (mirrors the PyTorch tau=False / boltzmann=False path).
# mxu_dtype=jnp.float32 reproduces the PyTorch f32 module; bfloat16 mirrors
# the kernel's MXU-operand casts for a tight numerical check.
# ----------------------------------------------------------------------------
def reference_forward(y1, y2, params, *, temp, mxu_dtype=jnp.float32):
    def cast(x):
        return x.astype(mxu_dtype)

    def encode(y):
        yf = cast(y).astype(jnp.float32)
        feat = jnp.mean(yf.reshape(y.shape[0], y.shape[1], -1), axis=2)
        h = jnp.dot(cast(feat), cast(params["wb"]),
                    preferred_element_type=jnp.float32) + params["bb"]
        h = jnp.maximum(jnp.dot(cast(h), cast(params["w1"]),
                                preferred_element_type=jnp.float32)
                        + params["b1"], 0.0)
        return jnp.dot(cast(h), cast(params["w2"]),
                       preferred_element_type=jnp.float32) + params["b2"]

    z1, z2 = encode(y1), encode(y2)
    z = jnp.concatenate([z1, z2], axis=0)
    z = z / jnp.maximum(jnp.linalg.norm(z, axis=1, keepdims=True), 1e-12)
    m = z.shape[0]
    n = m // 2
    logits = (z @ z.T) / temp
    eye = jnp.eye(m, dtype=bool)
    masked = jnp.where(eye, -1e30, logits)
    lse = jax.scipy.special.logsumexp(masked, axis=1)
    pos = logits[jnp.arange(m), (jnp.arange(m) + n) % m]
    return jnp.mean(lse - pos)


# ----------------------------------------------------------------------------
if __name__ == "__main__":
    # Small shapes consistent with the module's forward.
    B, C, H, W = 2, 4, 16, 16          # args.batch_size = 2, n_views = 2
    REP_DIM = 32                       # stand-in for model.fc.in_features
    HIDDEN = 64                        # args.mlp = "64-32"
    EMB_DIM = 32                       # embedding_dim = int(mlp.split('-')[-1])
    TEMP = 0.5                         # args.temp

    # Deterministic parameter init (synthetic, no checkpoint loading).
    kp = jax.random.PRNGKey(42)
    kwb, kw1, kw2 = jax.random.split(kp, 3)
    params = {
        "wb": 0.1 * jax.random.normal(kwb, (C, REP_DIM), jnp.float32),
        "bb": jnp.zeros((1, REP_DIM), jnp.float32),
        "w1": 0.1 * jax.random.normal(kw1, (REP_DIM, HIDDEN), jnp.float32),
        "b1": jnp.zeros((1, HIDDEN), jnp.float32),
        "w2": 0.1 * jax.random.normal(kw2, (HIDDEN, EMB_DIM), jnp.float32),
        "b2": jnp.zeros((1, EMB_DIM), jnp.float32),
    }
    # Pad / cast once at init.
    kparams = jax.block_until_ready(prepare_kernel_params(params))

    # Deterministic example inputs (two random "views" of the batch).
    key = jax.random.PRNGKey(0)
    k1, k2 = jax.random.split(key)
    y1 = jax.random.normal(k1, (B, C, H, W), jnp.float32)
    y2 = jax.random.normal(k2, (B, C, H, W), jnp.float32)

    loss = simclr_forward(y1, y2, kparams, temp=TEMP)
    loss = jax.block_until_ready(loss)

    # Tight check vs a reference using the same bf16 MXU-operand casts,
    # loose check vs the pure-f32 PyTorch-equivalent reference.
    ref_bf16 = reference_forward(y1, y2, params, temp=TEMP,
                                 mxu_dtype=jnp.bfloat16)
    ref_f32 = reference_forward(y1, y2, params, temp=TEMP)
    assert jnp.isfinite(loss), "loss is not finite"
    assert jnp.allclose(loss, ref_bf16, atol=5e-3), (loss, ref_bf16)
    assert jnp.allclose(loss, ref_f32, atol=1e-1), (loss, ref_f32)

    print("KERNEL_OK")
</pallas_src>

<mosaic_0001>
module attributes {stable_mosaic.version = 11 : i64} {
  func.func @simclr_fused_kernel(%arg0: memref<4x8x256xbf16, #tpu.memory_space<vmem>>, %arg1: memref<8x128xbf16, #tpu.memory_space<vmem>>, %arg2: memref<1x128xf32, #tpu.memory_space<vmem>>, %arg3: memref<128x128xbf16, #tpu.memory_space<vmem>>, %arg4: memref<1x128xf32, #tpu.memory_space<vmem>>, %arg5: memref<128x128xbf16, #tpu.memory_space<vmem>>, %arg6: memref<1x128xf32, #tpu.memory_space<vmem>>, %arg7: memref<1x1xf32, #tpu.memory_space<smem>>) attributes {dimension_semantics = [], scalar_prefetch = 0 : i64, scratch_operands = 0 : i64, tpu.core_type = #tpu.core_type<tc>} {
    %c0 = arith.constant 0 : index
    %c0_0 = arith.constant 0 : index
    %c0_1 = arith.constant 0 : index
    %0 = vector.load %arg0[%c0, %c0_0, %c0_1] : memref<4x8x256xbf16, #tpu.memory_space<vmem>>, vector<4x8x256xbf16>
    %1 = arith.extf %0 : vector<4x8x256xbf16> to vector<4x8x256xf32>
    %cst = arith.constant dense<0.000000e+00> : vector<4x8xf32>
    %2 = vector.multi_reduction <add>, %1, %cst [2] : vector<4x8x256xf32> to vector<4x8xf32>
    %cst_2 = arith.constant 3.906250e-03 : f32
    %3 = vector.broadcast %cst_2 : f32 to vector<4x8xf32>
    %4 = arith.mulf %2, %3 : vector<4x8xf32>
    %5 = arith.truncf %4 : vector<4x8xf32> to vector<4x8xbf16>
    %c0_3 = arith.constant 0 : index
    %c0_4 = arith.constant 0 : index
    %6 = vector.load %arg1[%c0_3, %c0_4] : memref<8x128xbf16, #tpu.memory_space<vmem>>, vector<8x128xbf16>
    %cst_5 = arith.constant dense<0.000000e+00> : vector<4x128xf32>
    %7 = tpu.matmul %5, %6, %cst_5 {dimension_numbers = #tpu.dot_dimension_numbers<[1], [0], [0], [1], [0, 0, 1, 1], [], []>} : vector<4x8xbf16>, vector<8x128xbf16>, vector<4x128xf32> -> vector<4x128xf32>
    %c0_6 = arith.constant 0 : index
    %c0_7 = arith.constant 0 : index
    %8 = vector.load %arg2[%c0_6, %c0_7] : memref<1x128xf32, #tpu.memory_space<vmem>>, vector<1x128xf32>
    %9 = vector.broadcast %8 : vector<1x128xf32> to vector<4x128xf32>
    %10 = arith.addf %7, %9 : vector<4x128xf32>
    %11 = arith.truncf %10 : vector<4x128xf32> to vector<4x128xbf16>
    %c0_8 = arith.constant 0 : index
    %c0_9 = arith.constant 0 : index
    %12 = vector.load %arg3[%c0_8, %c0_9] : memref<128x128xbf16, #tpu.memory_space<vmem>>, vector<128x128xbf16>
    %cst_10 = arith.constant dense<0.000000e+00> : vector<4x128xf32>
    %13 = tpu.matmul %11, %12, %cst_10 {dimension_numbers = #tpu.dot_dimension_numbers<[1], [0], [0], [1], [0, 0, 1, 1], [], []>} : vector<4x128xbf16>, vector<128x128xbf16>, vector<4x128xf32> -> vector<4x128xf32>
    %c0_11 = arith.constant 0 : index
    %c0_12 = arith.constant 0 : index
    %14 = vector.load %arg4[%c0_11, %c0_12] : memref<1x128xf32, #tpu.memory_space<vmem>>, vector<1x128xf32>
    %15 = vector.broadcast %14 : vector<1x128xf32> to vector<4x128xf32>
    %16 = arith.addf %13, %15 : vector<4x128xf32>
    %cst_13 = arith.constant 0.000000e+00 : f32
    %17 = vector.broadcast %cst_13 : f32 to vector<4x128xf32>
    %18 = arith.maximumf %16, %17 : vector<4x128xf32>
    %19 = arith.truncf %18 : vector<4x128xf32> to vector<4x128xbf16>
    %c0_14 = arith.constant 0 : index
    %c0_15 = arith.constant 0 : index
    %20 = vector.load %arg5[%c0_14, %c0_15] : memref<128x128xbf16, #tpu.memory_space<vmem>>, vector<128x128xbf16>
    %cst_16 = arith.constant dense<0.000000e+00> : vector<4x128xf32>
    %21 = tpu.matmul %19, %20, %cst_16 {dimension_numbers = #tpu.dot_dimension_numbers<[1], [0], [0], [1], [0, 0, 1, 1], [], []>} : vector<4x128xbf16>, vector<128x128xbf16>, vector<4x128xf32> -> vector<4x128xf32>
    %c0_17 = arith.constant 0 : index
    %c0_18 = arith.constant 0 : index
    %22 = vector.load %arg6[%c0_17, %c0_18] : memref<1x128xf32, #tpu.memory_space<vmem>>, vector<1x128xf32>
    %23 = vector.broadcast %22 : vector<1x128xf32> to vector<4x128xf32>
    %24 = arith.addf %21, %23 : vector<4x128xf32>
    %25 = arith.mulf %24, %24 : vector<4x128xf32>
    %cst_19 = arith.constant dense<0.000000e+00> : vector<4xf32>
    %26 = vector.multi_reduction <add>, %25, %cst_19 [1] : vector<4x128xf32> to vector<4xf32>
    %27 = vector.shape_cast %26 : vector<4xf32> to vector<4x1xf32>
    %cst_20 = arith.constant 1.000000e-24 : f32
    %28 = vector.broadcast %cst_20 : f32 to vector<4x1xf32>
    %29 = arith.maximumf %27, %28 : vector<4x1xf32>
    %30 = math.rsqrt %29 : vector<4x1xf32>
    %cst_21 = arith.constant 1.41421354 : f32
    %31 = vector.broadcast %cst_21 : f32 to vector<4x1xf32>
    %32 = arith.mulf %31, %30 : vector<4x1xf32>
    %33 = vector.broadcast %32 : vector<4x1xf32> to vector<4x128xf32>
    %34 = arith.mulf %24, %33 : vector<4x128xf32>
    %cst_22 = arith.constant dense<0.000000e+00> : vector<4x4xf32>
    %35 = tpu.matmul %34, %34, %cst_22 {dimension_numbers = #tpu.dot_dimension_numbers<[1], [1], [0], [0], [0, 0, 1, 0], [], []>} : vector<4x128xf32>, vector<4x128xf32>, vector<4x4xf32> -> vector<4x4xf32>
    %36 = tpu.iota {dimensions = array<i32: 0>} : vector<4x4xi32>
    %37 = tpu.iota {dimensions = array<i32: 1>} : vector<4x4xi32>
    %38 = arith.cmpi eq, %36, %37 : vector<4x4xi32>
    %cst_23 = arith.constant -1.000000e+30 : f32
    %39 = vector.broadcast %cst_23 : f32 to vector<4x4xf32>
    %40 = arith.select %38, %39, %35 : vector<4x4xi1>, vector<4x4xf32>
    %cst_24 = arith.constant dense<0xFF800000> : vector<4xf32>
    %41 = vector.multi_reduction <maximumf>, %40, %cst_24 [1] : vector<4x4xf32> to vector<4xf32>
    %42 = vector.shape_cast %41 : vector<4xf32> to vector<4x1xf32>
    %43 = vector.broadcast %42 : vector<4x1xf32> to vector<4x4xf32>
    %44 = arith.subf %40, %43 : vector<4x4xf32>
    %45 = math.exp %44 : vector<4x4xf32>
    %cst_25 = arith.constant dense<0.000000e+00> : vector<4xf32>
    %46 = vector.multi_reduction <add>, %45, %cst_25 [1] : vector<4x4xf32> to vector<4xf32>
    %47 = vector.shape_cast %46 : vector<4xf32> to vector<4x1xf32>
    %48 = math.log %47 : vector<4x1xf32>
    %49 = arith.addf %42, %48 : vector<4x1xf32>
    %50 = vector.extract_strided_slice %34 {offsets = [0, 0], sizes = [2, 128], strides = [1, 1]} : vector<4x128xf32> to vector<2x128xf32>
    %51 = vector.extract_strided_slice %34 {offsets = [2, 0], sizes = [2, 128], strides = [1, 1]} : vector<4x128xf32> to vector<2x128xf32>
    %52 = arith.mulf %50, %51 : vector<2x128xf32>
    %cst_26 = arith.constant dense<0.000000e+00> : vector<2xf32>
    %53 = vector.multi_reduction <add>, %52, %cst_26 [1] : vector<2x128xf32> to vector<2xf32>
    %54 = vector.shape_cast %53 : vector<2xf32> to vector<2x1xf32>
    %55 = vector.shape_cast %49 : vector<4x1xf32> to vector<1x4x1xf32>
    %cst_27 = arith.constant dense<0.000000e+00> : vector<1xf32>
    %56 = vector.multi_reduction <add>, %55, %cst_27 [1, 2] : vector<1x4x1xf32> to vector<1xf32>
    %57 = vector.shape_cast %56 : vector<1xf32> to vector<1x1x1xf32>
    %58 = vector.extract %57[0, 0, 0] : f32 from vector<1x1x1xf32>
    %cst_28 = arith.constant 4.000000e+00 : f32
    %59 = arith.divf %58, %cst_28 : f32
    %60 = vector.shape_cast %54 : vector<2x1xf32> to vector<1x2x1xf32>
    %cst_29 = arith.constant dense<0.000000e+00> : vector<1xf32>
    %61 = vector.multi_reduction <add>, %60, %cst_29 [1, 2] : vector<1x2x1xf32> to vector<1xf32>
    %62 = vector.shape_cast %61 : vector<1xf32> to vector<1x1x1xf32>
    %63 = vector.extract %62[0, 0, 0] : f32 from vector<1x1x1xf32>
    %cst_30 = arith.constant 2.000000e+00 : f32
    %64 = arith.divf %63, %cst_30 : f32
    %65 = arith.subf %59, %64 : f32
    %c0_31 = arith.constant 0 : index
    %c0_32 = arith.constant 0 : index
    %66 = memref.load %arg7[%c0_31, %c0_32] : memref<1x1xf32, #tpu.memory_space<smem>>
    memref.store %65, %arg7[%c0_31, %c0_32] : memref<1x1xf32, #tpu.memory_space<smem>>
    return
  }
}

</mosaic_0001>

<llo_original>
// kernel: tpu_custom_call.1
$region0: #{tpu_custom_call.1}
  #allocation0 [shape = 'u32[]', space=smem, size = 0x4, offset = 0x4, fixed_abs, tag = 'smem constant byte address 0x4 - core index']
  #allocation1 [shape = 'u32[72,128]{1,0:T(1,128)}', space=vmem, size = 0x9000, scoped, tag = 'internal scratch']
  %s0 = inlined_call_operand.hbm [shape: bf16[4,8,256], index: 0, kind: input, shape index: {}]
  %s1 = inlined_call_operand.hbm [shape: bf16[8,128], index: 1, kind: input, shape index: {}]
  %s2 = inlined_call_operand.vmem [shape: f32[1,128], index: 2, kind: input, shape index: {}]
  %s3 = inlined_call_operand.hbm [shape: bf16[128,128], index: 3, kind: input, shape index: {}]
  %s4 = inlined_call_operand.vmem [shape: f32[1,128], index: 4, kind: input, shape index: {}]
  %s5 = inlined_call_operand.hbm [shape: bf16[128,128], index: 5, kind: input, shape index: {}]
  %s6 = inlined_call_operand.vmem [shape: f32[1,128], index: 6, kind: input, shape index: {}]
  %s7 = inlined_call_operand.hbm [shape: f32[1,1], index: 7, kind: output, shape index: {}]
  %s8 = sld [smem:[#allocation0]]
  $region54: #{tpu_custom_call.1} parent=0
    _
  %s10 = ssub.s32 1, %s8
  %s11 = scalar_select 0, %s10, %s8
  $region1: #{tpu_custom_call.1} parent=0
    #allocation2 [shape = 'u8[16384]{0}', space=vmem, size = 0x4000, scoped, tag = 'input window, operand 0, single buffered']
    #allocation3 [shape = 's32[1]{0}', space=sflag, size = 0x4, scoped, tag = 'scoped memory for tpu_custom_call.1']
    #allocation4 [shape = 's32[1]{0}', space=sflag, size = 0x4, scoped, tag = 'scoped memory for tpu_custom_call.1']
    #allocation5 [shape = 'u8[2048]{0}', space=vmem, size = 0x800, scoped, tag = 'input window, operand 1, single buffered']
    #allocation6 [shape = 's32[1]{0}', space=sflag, size = 0x4, scoped, tag = 'scoped memory for tpu_custom_call.1']
    #allocation7 [shape = 'u8[32768]{0}', space=vmem, size = 0x8000, scoped, tag = 'input window, operand 3, single buffered']
    #allocation8 [shape = 'u8[32768]{0}', space=vmem, size = 0x8000, scoped, tag = 'input window, operand 5, single buffered']
    #allocation9 [shape = 's32[1]{0}', space=sflag, size = 0x4, scoped, tag = 'scoped memory for tpu_custom_call.1']
    #allocation10 [shape = 'u8[512]{0}', space=smem, size = 0x200, scoped, tag = 'output window, operand 0, single buffered']
    %12 = vsyncpa [#allocation3], 0
    %13 = vsyncpa [#allocation6], 0
    %14 = vsyncpa [#allocation9], 0
    %15 = vsyncpa [#allocation4], 0
    // Predicated region
    $region2: #{tpu_custom_call.1} parent=1 // pred_check
      _
    $region3: #{tpu_custom_call.1} parent=1 // pred_check_branch
      %17 = sbr.rel (0) target = $region5
    $region4: #{tpu_custom_call.1} parent=1 // pred_region
      %19 = vsyncadd [#allocation3], 0
      %s20 = sshll.u32 %s0, 4
      %s21 = int_to_ptr.hbm [resolvable:$true] %s20
      %s22 = sshll.u32 [#allocation2], 4
      %s23 = int_to_ptr.vmem [resolvable:$true] %s22
      %28 = dma.hbm_to_vmem [thread:$0]  %s21, 512, %s23, [#allocation3], 128, 128, 8
    $region5: #{tpu_custom_call.1} parent=1 // pred_fallthru
      _
    // Predicated region
    $region6: #{tpu_custom_call.1} parent=1 // pred_check
      _
    $region7: #{tpu_custom_call.1} parent=1 // pred_check_branch
      %30 = sbr.rel (0) target = $region9
    $region8: #{tpu_custom_call.1} parent=1 // pred_region
      %32 = vsyncadd [#allocation6], 0
      %s34 = sshll.u32 %s1, 4
      %s35 = int_to_ptr.hbm [resolvable:$true] %s34
      %s36 = sshll.u32 [#allocation5], 4
      %s37 = int_to_ptr.vmem [resolvable:$true] %s36
      %39 = dma.hbm_to_vmem [thread:$0]  %s35, 64, %s37, [#allocation6]
    $region9: #{tpu_custom_call.1} parent=1 // pred_fallthru
      _
    // Predicated region
    $region10: #{tpu_custom_call.1} parent=1 // pred_check
      _
    $region11: #{tpu_custom_call.1} parent=1 // pred_check_branch
      %41 = sbr.rel (0) target = $region13
    $region12: #{tpu_custom_call.1} parent=1 // pred_region
      _
    $region13: #{tpu_custom_call.1} parent=1 // pred_fallthru
      _
    // Predicated region
    $region14: #{tpu_custom_call.1} parent=1 // pred_check
      _
    $region15: #{tpu_custom_call.1} parent=1 // pred_check_branch
      %43 = sbr.rel (0) target = $region17
    $region16: #{tpu_custom_call.1} parent=1 // pred_region
      %45 = vsyncadd [#allocation6], 0
      %s46 = sshll.u32 %s3, 4
      %s47 = int_to_ptr.hbm [resolvable:$true] %s46
      %s48 = sshll.u32 [#allocation7], 4
      %s49 = int_to_ptr.vmem [resolvable:$true] %s48
      %54 = dma.hbm_to_vmem [thread:$0]  %s47, 1024, %s49, [#allocation6], 64, 64, 4
    $region17: #{tpu_custom_call.1} parent=1 // pred_fallthru
      _
    // Predicated region
    $region18: #{tpu_custom_call.1} parent=1 // pred_check
      _
    $region19: #{tpu_custom_call.1} parent=1 // pred_check_branch
      %56 = sbr.rel (0) target = $region21
    $region20: #{tpu_custom_call.1} parent=1 // pred_region
      _
    $region21: #{tpu_custom_call.1} parent=1 // pred_fallthru
      _
    // Predicated region
    $region22: #{tpu_custom_call.1} parent=1 // pred_check
      _
    $region23: #{tpu_custom_call.1} parent=1 // pred_check_branch
      %58 = sbr.rel (0) target = $region25
    $region24: #{tpu_custom_call.1} parent=1 // pred_region
      %60 = vsyncadd [#allocation9], 0
      %s61 = sshll.u32 %s5, 4
      %s62 = int_to_ptr.hbm [resolvable:$true] %s61
      %s63 = sshll.u32 [#allocation8], 4
      %s64 = int_to_ptr.vmem [resolvable:$true] %s63
      %69 = dma.hbm_to_vmem [thread:$0]  %s62, 1024, %s64, [#allocation9], 64, 64, 4
    $region25: #{tpu_custom_call.1} parent=1 // pred_fallthru
      _
    // Predicated region
    $region26: #{tpu_custom_call.1} parent=1 // pred_check
      _
    $region27: #{tpu_custom_call.1} parent=1 // pred_check_branch
      %71 = sbr.rel (0) target = $region29
    $region28: #{tpu_custom_call.1} parent=1 // pred_region
      _
    $region29: #{tpu_custom_call.1} parent=1 // pred_fallthru
      _
    // Predicated region
    $region30: #{tpu_custom_call.1} parent=1 // pred_check
      _
    $region31: #{tpu_custom_call.1} parent=1 // pred_check_branch
      %73 = sbr.rel (0) target = $region33
    $region32: #{tpu_custom_call.1} parent=1 // pred_region
      %75 = dma.done [#allocation3], 512
    $region33: #{tpu_custom_call.1} parent=1 // pred_fallthru
      _
    // Predicated region
    $region34: #{tpu_custom_call.1} parent=1 // pred_check
      _
    $region35: #{tpu_custom_call.1} parent=1 // pred_check_branch
      %77 = sbr.rel (0) target = $region37
    $region36: #{tpu_custom_call.1} parent=1 // pred_region
      %79 = dma.done [#allocation6], 64
    $region37: #{tpu_custom_call.1} parent=1 // pred_fallthru
      _
    // Predicated region
    $region38: #{tpu_custom_call.1} parent=1 // pred_check
      _
    $region39: #{tpu_custom_call.1} parent=1 // pred_check_branch
      %81 = sbr.rel (0) target = $region41
    $region40: #{tpu_custom_call.1} parent=1 // pred_region
      %83 = dma.done [#allocation6], 1024
    $region41: #{tpu_custom_call.1} parent=1 // pred_fallthru
      _
    // Predicated region
    $region42: #{tpu_custom_call.1} parent=1 // pred_check
      _
    $region43: #{tpu_custom_call.1} parent=1 // pred_check_branch
      %85 = sbr.rel (0) target = $region45
    $region44: #{tpu_custom_call.1} parent=1 // pred_region
      %87 = dma.done [#allocation9], 1024
    $region45: #{tpu_custom_call.1} parent=1 // pred_fallthru
      _
    %v89 = vld [vmem:[#allocation2] sm:$0xff]
    %v90 = vld [vmem:[#allocation2 + $0x8] sm:$0xff]
    %v91 = vld [vmem:[#allocation2 + $0x10] sm:$0xff]
    %v92 = vld [vmem:[#allocation2 + $0x18] sm:$0xff]
    %v93 = vunpack.c.l.bf16 %v89
    %v94 = vunpack.c.h.bf16 %v89
    %v95 = vunpack.c.l.bf16 %v90
    %v96 = vunpack.c.h.bf16 %v90
    %v97 = vunpack.c.l.bf16 %v91
    %v98 = vunpack.c.h.bf16 %v91
    %v99 = vunpack.c.l.bf16 %v92
    %v100 = vunpack.c.h.bf16 %v92
    %v101 = vadd.f32 %v93, %v94
    %102 = vadd.xlane.f32.xlu0 %v101
    %v103 = vpop.xlane.xlu0 %102
    %v104 = vadd.f32 %v95, %v96
    %105 = vadd.xlane.f32.xlu0 %v104
    %v106 = vpop.xlane.xlu0 %105
    %v107 = vadd.f32 %v97, %v98
    %108 = vadd.xlane.f32.xlu0 %v107
    %v109 = vpop.xlane.xlu0 %108
    %v110 = vadd.f32 %v99, %v100
    %111 = vadd.xlane.f32.xlu0 %v110
    %v112 = vpop.xlane.xlu0 %111
    %v113 = vmul.f32 %v103, 0.00390625
    %v114 = vmul.f32 %v106, 0.00390625
    %v115 = vmul.f32 %v109, 0.00390625
    %v116 = vmul.f32 %v112, 0.00390625
    %v117 = vpack.c.bf16 %v113, %v113
    %v118 = vpack.c.bf16 %v114, %v114
    %v119 = vpack.c.bf16 %v115, %v115
    %v120 = vpack.c.bf16 %v116, %v116
    %v121 = vld [vmem:[#allocation5] sm:$0xf]
    %v122 = vld [vmem:[%s2] sm:$0x1]
    %v124 = vperm.slane %v122, 0
    %v130 = vunpack.c.l.b16 %v117
    %v131 = vunpack.c.l.b16 %v118
    %v132 = vunpack.c.l.b16 %v119
    %v133 = vunpack.c.l.b16 %v120
    %v134 = vlaneseq
    %v135 = vand.u32 %v134, 127
    %v136 = vperm.slane %v130, %v135
    %v137 = vperm.slane %v131, %v135
    %v138 = vperm.slane %v132, %v135
    %v139 = vperm.slane %v133, %v135
    %vm140 = vcmask 1041409
    %v141 = vsel %vm140, %v137, %v136
    %vm142 = vcmask 1042434
    %v143 = vsel %vm142, %v138, %v141
    %vm144 = vcmask 1043459
    %v145 = vsel %vm144, %v139, %v143
    %v146 = vpack.c.b16 %v145, %v145
    %vm147 = vcmask 64512
    %v149 = vsel %vm147, %v146, 0
    %vm151 = vcmask 1043456
    %v153 = vsel %vm151, %v121, 0
    %155 = vmatpush.bf16.msra.mxu0 0
    %156 = vmatpush.bf16.msra.mxu0 0
    %157 = vmatpush.bf16.msra.mxu0 0
    %158 = vmatpush.bf16.msra.mxu0 0
    %159 = vmatpush.bf16.msra.mxu0 0
    %160 = vmatpush.bf16.msra.mxu0 0
    %161 = vmatpush.bf16.msra.mxu0 0
    %162 = vmatpush.bf16.msra.mxu0 %v153
    %163 = vmatmul.bf16.gmra.mxu0 %v149
    %v164 = vpop.f32.mrf.mxu0
    %v165 = vadd.f32 %v124, %v164
    %v166 = vpop.f32.mrf.mxu0
    %167 = vdwg.mxu0
    %v168 = vpack.c.bf16 %v165, %v165
    %v169 = vld [vmem:[#allocation7] sm:$0xf]
    %v170 = vld [vmem:[#allocation7 + $0x4] sm:$0xf]
    %v171 = vld [vmem:[#allocation7 + $0x8] sm:$0xf]
    %v172 = vld [vmem:[#allocation7 + $0xc] sm:$0xf]
    %v173 = vld [vmem:[#allocation7 + $0x10] sm:$0xf]
    %v174 = vld [vmem:[#allocation7 + $0x14] sm:$0xf]
    %v175 = vld [vmem:[#allocation7 + $0x18] sm:$0xf]
    %v176 = vld [vmem:[#allocation7 + $0x1c] sm:$0xf]
    %v177 = vld [vmem:[#allocation7 + $0x20] sm:$0xf]
    %v178 = vld [vmem:[#allocation7 + $0x24] sm:$0xf]
    %v179 = vld [vmem:[#allocation7 + $0x28] sm:$0xf]
    %v180 = vld [vmem:[#allocation7 + $0x2c] sm:$0xf]
    %v181 = vld [vmem:[#allocation7 + $0x30] sm:$0xf]
    %v182 = vld [vmem:[#allocation7 + $0x34] sm:$0xf]
    %v183 = vld [vmem:[#allocation7 + $0x38] sm:$0xf]
    %v184 = vld [vmem:[#allocation7 + $0x3c] sm:$0xf]
    %v185 = vld [vmem:[%s4] sm:$0x1]
    %v187 = vperm.slane %v185, 0
    %v205 = vunpack.c.l.b16 %v169
    %v206 = vunpack.c.l.b16 %v170
    %v207 = vunpack.c.l.b16 %v171
    %v208 = vunpack.c.l.b16 %v172
    %v209 = vunpack.c.l.b16 %v173
    %v210 = vunpack.c.l.b16 %v174
    %v211 = vunpack.c.l.b16 %v175
    %v212 = vunpack.c.l.b16 %v176
    %v213 = vunpack.c.l.b16 %v177
    %v214 = vunpack.c.l.b16 %v178
    %v215 = vunpack.c.l.b16 %v179
    %v216 = vunpack.c.l.b16 %v180
    %v217 = vunpack.c.l.b16 %v181
    %v218 = vunpack.c.l.b16 %v182
    %v219 = vunpack.c.l.b16 %v183
    %v220 = vunpack.c.l.b16 %v184
    %v221 = vpack.c.b16 %v206, %v205
    %v222 = vpack.c.b16 %v208, %v207
    %v223 = vpack.c.b16 %v210, %v209
    %v224 = vpack.c.b16 %v212, %v211
    %v225 = vpack.c.b16 %v214, %v213
    %v226 = vpack.c.b16 %v216, %v215
    %v227 = vpack.c.b16 %v218, %v217
    %v228 = vpack.c.b16 %v220, %v219
    %237 = vmatpush.bf16.msra.mxu0 %v228
    %238 = vmatpush.bf16.msra.mxu0 %v227
    %239 = vmatpush.bf16.msra.mxu0 %v226
    %240 = vmatpush.bf16.msra.mxu0 %v225
    %241 = vmatpush.bf16.msra.mxu0 %v224
    %242 = vmatpush.bf16.msra.mxu0 %v223
    %243 = vmatpush.bf16.msra.mxu0 %v222
    %244 = vmatpush.bf16.msra.mxu0 %v221
    %245 = vmatmul.bf16.gmra.mxu0 %v168
    %v246 = vpop.f32.mrf.mxu0
    %v247 = vadd.f32 %v187, %v246
    %v248 = vpop.f32.mrf.mxu0
    %249 = vdwg.mxu0
    %v250 = vmax.f32 %v247, 0.0
    %v251 = vpack.c.bf16 %v250, %v250
    %v252 = vld [vmem:[#allocation8] sm:$0xf]
    %v253 = vld [vmem:[#allocation8 + $0x4] sm:$0xf]
    %v254 = vld [vmem:[#allocation8 + $0x8] sm:$0xf]
    %v255 = vld [vmem:[#allocation8 + $0xc] sm:$0xf]
    %v256 = vld [vmem:[#allocation8 + $0x10] sm:$0xf]
    %v257 = vld [vmem:[#allocation8 + $0x14] sm:$0xf]
    %v258 = vld [vmem:[#allocation8 + $0x18] sm:$0xf]
    %v259 = vld [vmem:[#allocation8 + $0x1c] sm:$0xf]
    %v260 = vld [vmem:[#allocation8 + $0x20] sm:$0xf]
    %v261 = vld [vmem:[#allocation8 + $0x24] sm:$0xf]
    %v262 = vld [vmem:[#allocation8 + $0x28] sm:$0xf]
    %v263 = vld [vmem:[#allocation8 + $0x2c] sm:$0xf]
    %v264 = vld [vmem:[#allocation8 + $0x30] sm:$0xf]
    %v265 = vld [vmem:[#allocation8 + $0x34] sm:$0xf]
    %v266 = vld [vmem:[#allocation8 + $0x38] sm:$0xf]
    %v267 = vld [vmem:[#allocation8 + $0x3c] sm:$0xf]
    %v268 = vld [vmem:[%s6] sm:$0x1]
    %v270 = vperm.slane %v268, 0
    %v288 = vunpack.c.l.b16 %v252
    %v289 = vunpack.c.l.b16 %v253
    %v290 = vunpack.c.l.b16 %v254
    %v291 = vunpack.c.l.b16 %v255
    %v292 = vunpack.c.l.b16 %v256
    %v293 = vunpack.c.l.b16 %v257
    %v294 = vunpack.c.l.b16 %v258
    %v295 = vunpack.c.l.b16 %v259
    %v296 = vunpack.c.l.b16 %v260
    %v297 = vunpack.c.l.b16 %v261
    %v298 = vunpack.c.l.b16 %v262
    %v299 = vunpack.c.l.b16 %v263
    %v300 = vunpack.c.l.b16 %v264
    %v301 = vunpack.c.l.b16 %v265
    %v302 = vunpack.c.l.b16 %v266
    %v303 = vunpack.c.l.b16 %v267
    %v304 = vpack.c.b16 %v289, %v288
    %v305 = vpack.c.b16 %v291, %v290
    %v306 = vpack.c.b16 %v293, %v292
    %v307 = vpack.c.b16 %v295, %v294
    %v308 = vpack.c.b16 %v297, %v296
    %v309 = vpack.c.b16 %v299, %v298
    %v310 = vpack.c.b16 %v301, %v300
    %v311 = vpack.c.b16 %v303, %v302
    %320 = vmatpush.bf16.msra.mxu0 %v311
    %321 = vmatpush.bf16.msra.mxu0 %v310
    %322 = vmatpush.bf16.msra.mxu0 %v309
    %323 = vmatpush.bf16.msra.mxu0 %v308
    %324 = vmatpush.bf16.msra.mxu0 %v307
    %325 = vmatpush.bf16.msra.mxu0 %v306
    %326 = vmatpush.bf16.msra.mxu0 %v305
    %327 = vmatpush.bf16.msra.mxu0 %v304
    %328 = vmatmul.bf16.gmra.mxu0 %v251
    %v329 = vpop.f32.mrf.mxu0
    %v330 = vadd.f32 %v270, %v329
    %v331 = vpop.f32.mrf.mxu0
    %332 = vdwg.mxu0
    %v333 = vmul.f32 %v330, %v330
    %v334 = vsel %vm151, %v333, 0.0
    %335 = vadd.xlane.f32.xlu0 %v334
    %v336 = vpop.xlane.xlu0 %335
    %v337 = vmax.f32 %v336, 1e-24
    %v338 = vrsqrt.pop %v337
    %v339 = vmul.f32 %v338, %v337
    %v340 = vmul.f32 %v339, %v338
    %v341 = vmul.f32 0.5, %v340
    %v342 = vsub.f32 1.5, %v341
    %v343 = vmul.f32 %v338, %v342
    %vm344 = vweird.f32 %v337
    %vm345 = vweird.f32 %v338
    %vm346 = vmor %vm344, %vm345
    %v347 = vsel %vm346, %v338, %v343
    %v348 = vmul.f32 %v347, 1.4142135
    %v349 = vmul.f32 %v330, %v348
    %350 = vmatpush.xpose.msra.mxu0 0.0
    %351 = vmatpush.xpose.msra.mxu0 0.0
    %352 = vmatpush.xpose.msra.mxu0 0.0
    %353 = vmatpush.xpose.msra.mxu0 0.0
    %354 = vmatpush.xpose.msra.mxu0 0.0
    %355 = vmatpush.xpose.msra.mxu0 0.0
    %356 = vmatpush.xpose.msra.mxu0 0.0
    %357 = vmatpush.xpose.msra.mxu0 0.0
    %358 = vmatpush.xpose.msra.mxu0 0.0
    %359 = vmatpush.xpose.msra.mxu0 0.0
    %360 = vmatpush.xpose.msra.mxu0 0.0
    %361 = vmatpush.xpose.msra.mxu0 0.0
    %362 = vmatpush.xpose.msra.mxu0 0.0
    %363 = vmatpush.xpose.msra.mxu0 0.0
    %364 = vmatpush.xpose.msra.mxu0 0.0
    %365 = vmatpush.xpose.msra.mxu0 %v349
    %366 = vmatmul.f32.gmra.mxu0 %v349
    %v367 = vpop.f32.mrf.mxu0
    %v368 = vadd.f32 0.0, %v367
    %369 = vdwg.mxu0
    %v370 = vlaneseq
    %v371 = vshrl.u32 %v370, 7
    %vm372 = vcmp.eq.s32.totalorder %v371, %v135
    %v373 = vsel %vm372, -1e+30, %v368
    %vm374 = vcmask 27648
    %v375 = vsel %vm374, %v373, -inf
    %376 = vmax.xlane.f32.xlu0 %v375
    %v377 = vpop.xlane.xlu0 %376
    %v378 = vsub.f32 %v373, %v377
    %v379 = vmul.f32 %v378, 1.442695
    %v380 = vpow.pop %v379
    %v381 = vsel %vm374, %v380, 0.0
    %382 = vadd.xlane.f32.xlu0 %v381
    %v383 = vpop.xlane.xlu0 %382
    %v384 = vlog2.pop %v383
    %v385 = vmul.f32 %v384, 0.6931472
    %v386 = vadd.f32 %v377, %v385
    %v388 = vrot.slane %v349, 2
    %v390 = vmul.f32 %v349, %v388
    %vm391 = vcmask 1041408
    %v392 = vsel %vm391, %v390, 0.0
    %393 = vadd.xlane.f32.xlu0 %v392
    %v394 = vpop.xlane.xlu0 %393
    %vm395 = vcmask 3072
    %v396 = vsel %vm395, %v386, 0.0
    %397 = vadd.xlane.f32.xlu0 %v396
    %v398 = vpop.xlane.xlu0 %397
    %v399 = vrot.slane %v398, 4
    %v400 = vadd.f32 %v398, %v399
    %v401 = vrot.slane %v400, 2
    %v402 = vadd.f32 %v400, %v401
    %v403 = vrot.slane %v402, 1
    %v404 = vadd.f32 %v402, %v403
    %s405 = vtos %v404
    %v406 = vrcp.pop 4.0
    %v407 = vmul.f32 4.0, %v406
    %v408 = vsub.f32 1.0, %v407
    %v409 = vmul.f32 %v406, %v408
    %v410 = vadd.f32 %v406, %v409
    %vm411 = vweird.f32 %v406
    %v412 = vsel %vm411, %v406, %v410
    %s413 = vtos %v412
    %s414 = smul.f32 %s405, %s413
    %vm415 = vcmask 1024
    %v416 = vsel %vm415, %v394, 0.0
    %417 = vadd.xlane.f32.xlu0 %v416
    %v418 = vpop.xlane.xlu0 %417
    %v419 = vrot.slane %v418, 4
    %v420 = vadd.f32 %v418, %v419
    %v421 = vrot.slane %v420, 2
    %v422 = vadd.f32 %v420, %v421
    %v423 = vrot.slane %v422, 1
    %v424 = vadd.f32 %v422, %v423
    %s425 = vtos %v424
    %v426 = vrcp.pop 2.0
    %v427 = vmul.f32 2.0, %v426
    %v428 = vsub.f32 1.0, %v427
    %v429 = vmul.f32 %v426, %v428
    %v430 = vadd.f32 %v426, %v429
    %vm431 = vweird.f32 %v426
    %v432 = vsel %vm431, %v426, %v430
    %s433 = vtos %v432
    %s434 = smul.f32 %s425, %s433
    %s435 = ssub.f32 %s414, %s434
    %s436 = scalar_lea.smem [#allocation10], 0
    %437 = sst [smem:[%s436]] %s435
    // Predicated region
    $region46: #{tpu_custom_call.1} parent=1 // pred_check
      _
    $region47: #{tpu_custom_call.1} parent=1 // pred_check_branch
      %439 = sbr.rel (0) target = $region49
    $region48: #{tpu_custom_call.1} parent=1 // pred_region
      %441 = vsyncadd [#allocation4], 0
      %s443 = sshll.u32 %s7, 4
      %s444 = int_to_ptr.hbm [resolvable:$true] %s443
      %446 = dma.smem_to_hbm [#allocation10], 16, %s444, [#allocation4]
    $region49: #{tpu_custom_call.1} parent=1 // pred_fallthru
      _
    // Predicated region
    $region50: #{tpu_custom_call.1} parent=1 // pred_check
      _
    $region51: #{tpu_custom_call.1} parent=1 // pred_check_branch
      %448 = sbr.rel (0) target = $region53
    $region52: #{tpu_custom_call.1} parent=1 // pred_region
      %450 = dma.done [#allocation4], 16
    $region53: #{tpu_custom_call.1} parent=1 // pred_fallthru
      _
    %451 = sfence
    %452 = vsyncpa [#allocation3], 1
    %453 = vsyncpa [#allocation6], 1
    %454 = vsyncpa [#allocation9], 1
    %455 = vsyncpa [#allocation4], 1

</llo_original>
